<compile_context>
chip_gen: v6e
topology: v6e:2x2x1
jax: 0.10.0
libtpu: 0.0.40
codegen_flags: <defaults>
</compile_context>

<pallas_src>
import jax
import jax.numpy as jnp
from jax.experimental import pallas as pl
from jax.experimental.pallas import tpu as pltpu


def _round_up(x, m):
    return ((x + m - 1) // m) * m


def _make_fused_kernel(cfgs, n_lanes, wrow):
    """Build the fused conv-stack kernel for a static list of layer configs."""

    def kernel(x_ref, w_ref, o_ref):
        act = x_ref[...]                                   # (cin0, B*L) f32
        for c in cfgs:
            cin, cout, k, K, row0 = c["cin"], c["cout"], c["k"], c["K"], c["row"]
            # im2col: every kernel tap (kh, kw) is a static lane rotation of the
            # row-flattened activation (pitch = wrow).  Rolling by n_lanes - s is
            # the circular equivalent of shifting left by s, so rotated[j] = act[j+s];
            # the wrap only lands in per-image tail garbage columns (see wrapper assert).
            pieces = []
            for kh in range(k):
                for kw in range(k):
                    s = kh * wrow + kw
                    pieces.append(act if s == 0
                                  else pltpu.roll(act, shift=n_lanes - s, axis=1))
            # Constant-one rows: the bias column (and K-padding zeros) is then
            # accumulated by the MXU for free.
            pieces.append(jnp.ones((K - k * k * cin, n_lanes), act.dtype))
            patch = jnp.concatenate(pieces, axis=0).astype(jnp.bfloat16)   # (K, B*L)
            w = w_ref[row0:row0 + cout, 0:K]                               # (cout, K) bf16
            acc = jnp.dot(w, patch, preferred_element_type=jnp.float32)    # conv + bias
            act = jnp.maximum(acc, 0.0)                                    # ReLU, f32
        o_ref[...] = act                                   # (cN, B*L) f32, lane-dense

    return kernel


def conv2d_model_forward(params, x, kernel_sizes, strides, paddings):
    """Equivalent of Conv2dModel.forward: stacked Conv2d + ReLU, NCHW in/out."""
    B, c0, H, W = x.shape
    p0 = paddings[0]
    for li, (s, p) in enumerate(zip(strides, paddings)):
        if s != 1 or (li > 0 and p != 0):
            # TODO(synk): stride>1 (maxpool path) and inner-layer padding not implemented.
            raise NotImplementedError("only stride=1 and padding on the first layer supported")

    Hp, Wp = H + 2 * p0, W + 2 * p0
    wrow = Wp                                  # constant row pitch of the flat layout

    # --- static per-layer geometry ---
    cins, couts, houts, wouts = [], [], [], []
    cin, hin, win = c0, Hp, Wp
    for (wt, _b), k in zip(params, kernel_sizes):
        cout = wt.shape[0]
        hout, wout = hin - k + 1, win - k + 1
        cins.append(cin); couts.append(cout); houts.append(hout); wouts.append(wout)
        cin, hin, win = cout, hout, wout
    cN, hN, wN = couts[-1], houts[-1], wouts[-1]

    # Per-image lane pitch (multiple of 128 -> lane-dense slab) and total GEMM N.
    L = _round_up(Hp * Wp, 128)
    NT = B * L

    # Static safety check (ties the flat layout to the geometry): the deepest tap
    # read for any *valid* final output must stay inside the real padded-image
    # slab, so roll wraparound / zero-tail / cross-image data can never leak
    # into valid outputs.
    max_read = (hN - 1) * wrow + (wN - 1)
    for k in reversed(kernel_sizes):
        max_read += (k - 1) * (wrow + 1)
    assert max_read < Hp * Wp <= L, (max_read, Hp * Wp, L)

    # --- input slab: spatial pad, flatten rows (pitch wrow), lane-pad, batch -> lanes ---
    xp = jnp.pad(x, ((0, 0), (0, 0), (p0, p0), (p0, p0))).reshape(B, c0, Hp * Wp)
    xp = jnp.pad(xp, ((0, 0), (0, 0), (0, L - Hp * Wp)))
    xflat = xp.transpose(1, 0, 2).reshape(c0, NT).astype(jnp.float32)

    # --- weight slab: one bf16 array holding every layer's [weights | bias | zeros] ---
    cfgs, blocks = [], []
    row = 0
    for (wt, bias), k, cin_l, cout in zip(params, kernel_sizes, cins, couts):
        kk = k * k * cin_l
        extra = ((-kk) % 8) or 8             # >=1 spare column for the bias, K % 8 == 0
        K = kk + extra
        # Weight columns ordered (kh, kw, cin) to match the in-kernel patch row order.
        wr = jnp.transpose(wt, (0, 2, 3, 1)).reshape(cout, kk)
        wb = jnp.concatenate(
            [wr, bias.reshape(cout, 1), jnp.zeros((cout, extra - 1), wt.dtype)], axis=1)
        cfgs.append(dict(cin=cin_l, cout=cout, k=k, K=K, row=row))
        blocks.append((row, wb))
        row = _round_up(row + cout, 8)
    slab_rows = _round_up(row, 8)
    slab_lanes = _round_up(max(c["K"] for c in cfgs), 128)
    wslab = jnp.zeros((slab_rows, slab_lanes), jnp.float32)
    for r0, wb in blocks:
        wslab = wslab.at[r0:r0 + wb.shape[0], 0:wb.shape[1]].set(wb)
    wslab = wslab.astype(jnp.bfloat16)

    flops = sum(2 * c["cout"] * c["K"] * NT for c in cfgs)
    bytes_accessed = xflat.size * 4 + wslab.size * 2 + cN * NT * 4

    out = pl.pallas_call(
        _make_fused_kernel(cfgs, NT, wrow),
        out_shape=jax.ShapeDtypeStruct((cN, NT), jnp.float32),
        in_specs=[pl.BlockSpec(memory_space=pltpu.MemorySpace.VMEM),
                  pl.BlockSpec(memory_space=pltpu.MemorySpace.VMEM)],
        out_specs=pl.BlockSpec(memory_space=pltpu.MemorySpace.VMEM),
        cost_estimate=pl.CostEstimate(
            flops=flops, transcendentals=0, bytes_accessed=bytes_accessed),
    )(xflat, wslab)

    # Crop the wrap/garbage columns (cheap XLA glue; the kernel's store stays lane-dense).
    out = out.reshape(cN, B, L).transpose(1, 0, 2)
    return out[:, :, :hN * wrow].reshape(B, cN, hN, wrow)[:, :, :, :wN]


def init_conv_params(key, in_channels, channels, kernel_sizes):
    """Deterministic PyTorch-like uniform init for each Conv2d layer."""
    params = []
    ic = in_channels
    for oc, k in zip(channels, kernel_sizes):
        key, kw_key, kb_key = jax.random.split(key, 3)
        fan_in = ic * k * k
        bound = 1.0 / (fan_in ** 0.5)
        w = jax.random.uniform(kw_key, (oc, ic, k, k), jnp.float32, -bound, bound)
        b = jax.random.uniform(kb_key, (oc,), jnp.float32, -bound, bound)
        params.append((w, b))
        ic = oc
    return params


def _reference_forward(params, x, strides, paddings):
    """Plain-JAX reference (lax conv, f32) for a correctness check."""
    for (w, b), s, p in zip(params, strides, paddings):
        y = jax.lax.conv_general_dilated(
            x, w, window_strides=(s, s), padding=[(p, p), (p, p)],
            dimension_numbers=("NCHW", "OIHW", "NCHW"),
            precision=jax.lax.Precision.HIGHEST)
        x = jnp.maximum(y + b[None, :, None, None], 0.0)
    return x


if __name__ == "__main__":
    # Model hyper-parameters (mirrors Conv2dModel.__init__ args)
    in_channels = 4
    channels = [8, 16]
    kernel_sizes = [3, 3]
    strides = [1, 1]
    paddings = [1, 0]

    key = jax.random.PRNGKey(0)
    key, xkey = jax.random.split(key)
    x = jax.random.normal(xkey, (2, in_channels, 16, 16), jnp.float32)  # [B,C,H,W]

    params = init_conv_params(key, in_channels, channels, kernel_sizes)

    out = jax.block_until_ready(
        conv2d_model_forward(params, x, kernel_sizes, strides, paddings))
    ref = jax.block_until_ready(_reference_forward(params, x, strides, paddings))

    assert out.shape == ref.shape == (2, channels[-1], 14, 14), out.shape
    assert jnp.allclose(out, ref, atol=1e-2, rtol=1e-2), float(
        jnp.max(jnp.abs(out - ref)))

    print("KERNEL_OK")
</pallas_src>

<mosaic_0001>
module attributes {stable_mosaic.version = 11 : i64} {
  func.func @kernel(%arg0: memref<4x768xf32, #tpu.memory_space<vmem>>, %arg1: memref<24x128xbf16, #tpu.memory_space<vmem>>, %arg2: memref<16x768xf32, #tpu.memory_space<vmem>>) attributes {dimension_semantics = [], scalar_prefetch = 0 : i64, scratch_operands = 0 : i64, tpu.core_type = #tpu.core_type<tc>} {
    %c0 = arith.constant 0 : index
    %c0_0 = arith.constant 0 : index
    %0 = vector.load %arg0[%c0, %c0_0] : memref<4x768xf32, #tpu.memory_space<vmem>>, vector<4x768xf32>
    %c767_i32 = arith.constant 767 : i32
    %1 = tpu.dynamic_rotate %0 by %c767_i32 dim 1 : vector<4x768xf32>, i32 -> vector<4x768xf32>
    %c766_i32 = arith.constant 766 : i32
    %2 = tpu.dynamic_rotate %0 by %c766_i32 dim 1 : vector<4x768xf32>, i32 -> vector<4x768xf32>
    %c750_i32 = arith.constant 750 : i32
    %3 = tpu.dynamic_rotate %0 by %c750_i32 dim 1 : vector<4x768xf32>, i32 -> vector<4x768xf32>
    %c749_i32 = arith.constant 749 : i32
    %4 = tpu.dynamic_rotate %0 by %c749_i32 dim 1 : vector<4x768xf32>, i32 -> vector<4x768xf32>
    %c748_i32 = arith.constant 748 : i32
    %5 = tpu.dynamic_rotate %0 by %c748_i32 dim 1 : vector<4x768xf32>, i32 -> vector<4x768xf32>
    %c732_i32 = arith.constant 732 : i32
    %6 = tpu.dynamic_rotate %0 by %c732_i32 dim 1 : vector<4x768xf32>, i32 -> vector<4x768xf32>
    %c731_i32 = arith.constant 731 : i32
    %7 = tpu.dynamic_rotate %0 by %c731_i32 dim 1 : vector<4x768xf32>, i32 -> vector<4x768xf32>
    %c730_i32 = arith.constant 730 : i32
    %8 = tpu.dynamic_rotate %0 by %c730_i32 dim 1 : vector<4x768xf32>, i32 -> vector<4x768xf32>
    %cst = arith.constant 1.000000e+00 : f32
    %9 = vector.broadcast %cst : f32 to vector<4x768xf32>
    %10 = tpu.concatenate %0, %1, %2, %3, %4, %5, %6, %7, %8, %9 in 0 : vector<4x768xf32>, vector<4x768xf32>, vector<4x768xf32>, vector<4x768xf32>, vector<4x768xf32>, vector<4x768xf32>, vector<4x768xf32>, vector<4x768xf32>, vector<4x768xf32>, vector<4x768xf32> -> vector<40x768xf32>
    %11 = arith.truncf %10 : vector<40x768xf32> to vector<40x768xbf16>
    %c0_1 = arith.constant 0 : index
    %c0_2 = arith.constant 0 : index
    %12 = vector.load %arg1[%c0_1, %c0_2] : memref<24x128xbf16, #tpu.memory_space<vmem>>, vector<8x40xbf16>
    %cst_3 = arith.constant dense<0.000000e+00> : vector<8x768xf32>
    %13 = tpu.matmul %12, %11, %cst_3 {dimension_numbers = #tpu.dot_dimension_numbers<[1], [0], [0], [1], [0, 0, 1, 1], [], []>} : vector<8x40xbf16>, vector<40x768xbf16>, vector<8x768xf32> -> vector<8x768xf32>
    %cst_4 = arith.constant 0.000000e+00 : f32
    %14 = vector.broadcast %cst_4 : f32 to vector<8x768xf32>
    %15 = arith.maximumf %13, %14 : vector<8x768xf32>
    %c767_i32_5 = arith.constant 767 : i32
    %16 = tpu.dynamic_rotate %15 by %c767_i32_5 dim 1 : vector<8x768xf32>, i32 -> vector<8x768xf32>
    %c766_i32_6 = arith.constant 766 : i32
    %17 = tpu.dynamic_rotate %15 by %c766_i32_6 dim 1 : vector<8x768xf32>, i32 -> vector<8x768xf32>
    %c750_i32_7 = arith.constant 750 : i32
    %18 = tpu.dynamic_rotate %15 by %c750_i32_7 dim 1 : vector<8x768xf32>, i32 -> vector<8x768xf32>
    %c749_i32_8 = arith.constant 749 : i32
    %19 = tpu.dynamic_rotate %15 by %c749_i32_8 dim 1 : vector<8x768xf32>, i32 -> vector<8x768xf32>
    %c748_i32_9 = arith.constant 748 : i32
    %20 = tpu.dynamic_rotate %15 by %c748_i32_9 dim 1 : vector<8x768xf32>, i32 -> vector<8x768xf32>
    %c732_i32_10 = arith.constant 732 : i32
    %21 = tpu.dynamic_rotate %15 by %c732_i32_10 dim 1 : vector<8x768xf32>, i32 -> vector<8x768xf32>
    %c731_i32_11 = arith.constant 731 : i32
    %22 = tpu.dynamic_rotate %15 by %c731_i32_11 dim 1 : vector<8x768xf32>, i32 -> vector<8x768xf32>
    %c730_i32_12 = arith.constant 730 : i32
    %23 = tpu.dynamic_rotate %15 by %c730_i32_12 dim 1 : vector<8x768xf32>, i32 -> vector<8x768xf32>
    %cst_13 = arith.constant 1.000000e+00 : f32
    %24 = vector.broadcast %cst_13 : f32 to vector<8x768xf32>
    %25 = tpu.concatenate %15, %16, %17, %18, %19, %20, %21, %22, %23, %24 in 0 : vector<8x768xf32>, vector<8x768xf32>, vector<8x768xf32>, vector<8x768xf32>, vector<8x768xf32>, vector<8x768xf32>, vector<8x768xf32>, vector<8x768xf32>, vector<8x768xf32>, vector<8x768xf32> -> vector<80x768xf32>
    %26 = arith.truncf %25 : vector<80x768xf32> to vector<80x768xbf16>
    %c8 = arith.constant 8 : index
    %c0_14 = arith.constant 0 : index
    %27 = vector.load %arg1[%c8, %c0_14] : memref<24x128xbf16, #tpu.memory_space<vmem>>, vector<16x80xbf16>
    %cst_15 = arith.constant dense<0.000000e+00> : vector<16x768xf32>
    %28 = tpu.matmul %27, %26, %cst_15 {dimension_numbers = #tpu.dot_dimension_numbers<[1], [0], [0], [1], [0, 0, 1, 1], [], []>} : vector<16x80xbf16>, vector<80x768xbf16>, vector<16x768xf32> -> vector<16x768xf32>
    %cst_16 = arith.constant 0.000000e+00 : f32
    %29 = vector.broadcast %cst_16 : f32 to vector<16x768xf32>
    %30 = arith.maximumf %28, %29 : vector<16x768xf32>
    %c0_17 = arith.constant 0 : index
    %c0_18 = arith.constant 0 : index
    %31 = vector.load %arg2[%c0_17, %c0_18] : memref<16x768xf32, #tpu.memory_space<vmem>>, vector<16x768xf32>
    tpu.vector_store %arg2[%c0_17, %c0_18], %30 {strides = array<i32>} : memref<16x768xf32, #tpu.memory_space<vmem>>, vector<16x768xf32>,
    return
  }
}

</mosaic_0001>

<llo_original>
// kernel: tpu_custom_call.1
$region0: #{tpu_custom_call.1}
  #allocation0 [shape = 'u32[]', space=smem, size = 0x4, offset = 0x4, fixed_abs, tag = 'smem constant byte address 0x4 - core index']
  #allocation1 [shape = 'u32[144,128]{1,0:T(1,128)}', space=vmem, size = 0x12000, scoped, tag = 'internal scratch']
  %s0 = inlined_call_operand.hbm [shape: f32[4,768], index: 0, kind: input, shape index: {}]
  %s1 = inlined_call_operand.hbm [shape: bf16[24,128], index: 1, kind: input, shape index: {}]
  %s2 = inlined_call_operand.hbm [shape: f32[16,768], index: 2, kind: output, shape index: {}]
  %s3 = sld [smem:[#allocation0]]
  $region26: #{tpu_custom_call.1} parent=0
    _
  %s5 = ssub.s32 1, %s3
  %s6 = scalar_select 0, %s5, %s3
  $region1: #{tpu_custom_call.1} parent=0
    #allocation2 [shape = 'u8[12288]{0}', space=vmem, size = 0x3000, scoped, tag = 'input window, operand 0, single buffered']
    #allocation3 [shape = 's32[1]{0}', space=sflag, size = 0x4, scoped, tag = 'scoped memory for tpu_custom_call.1']
    #allocation4 [shape = 's32[1]{0}', space=sflag, size = 0x4, scoped, tag = 'scoped memory for tpu_custom_call.1']
    #allocation5 [shape = 'u8[6144]{0}', space=vmem, size = 0x1800, scoped, tag = 'input window, operand 1, single buffered']
    #allocation6 [shape = 's32[1]{0}', space=sflag, size = 0x4, scoped, tag = 'scoped memory for tpu_custom_call.1']
    #allocation7 [shape = 'u8[49152]{0}', space=vmem, size = 0xc000, scoped, tag = 'output window, operand 0, single buffered']
    %7 = vsyncpa [#allocation3], 0
    %8 = vsyncpa [#allocation6], 0
    %9 = vsyncpa [#allocation4], 0
    // Predicated region
    $region2: #{tpu_custom_call.1} parent=1 // pred_check
      _
    $region3: #{tpu_custom_call.1} parent=1 // pred_check_branch
      %11 = sbr.rel (0) target = $region5
    $region4: #{tpu_custom_call.1} parent=1 // pred_region
      %s13 = ssub.s32 384, 384
      %14 = vsyncadd [#allocation3], %s13
      %s16 = sshll.u32 [#allocation2], 4
      %s17 = int_to_ptr.vmem [resolvable:$true] %s16
      %19 = dma.hbm_to_vmem [thread:$0]  %s0, 384, %s17, [#allocation3]
    $region5: #{tpu_custom_call.1} parent=1 // pred_fallthru
      _
    // Predicated region
    $region6: #{tpu_custom_call.1} parent=1 // pred_check
      _
    $region7: #{tpu_custom_call.1} parent=1 // pred_check_branch
      %21 = sbr.rel (0) target = $region9
    $region8: #{tpu_custom_call.1} parent=1 // pred_region
      %s23 = ssub.s32 192, 192
      %24 = vsyncadd [#allocation6], %s23
      %s25 = sshll.u32 [#allocation5], 4
      %s26 = int_to_ptr.vmem [resolvable:$true] %s25
      %31 = dma.hbm_to_vmem [thread:$0]  %s1, 192, %s26, [#allocation6], 64, 64, 4
    $region9: #{tpu_custom_call.1} parent=1 // pred_fallthru
      _
    // Predicated region
    $region10: #{tpu_custom_call.1} parent=1 // pred_check
      _
    $region11: #{tpu_custom_call.1} parent=1 // pred_check_branch
      %33 = sbr.rel (0) target = $region13
    $region12: #{tpu_custom_call.1} parent=1 // pred_region
      %34 = dma.done [#allocation3], 384
    $region13: #{tpu_custom_call.1} parent=1 // pred_fallthru
      _
    // Predicated region
    $region14: #{tpu_custom_call.1} parent=1 // pred_check
      _
    $region15: #{tpu_custom_call.1} parent=1 // pred_check_branch
      %36 = sbr.rel (0) target = $region17
    $region16: #{tpu_custom_call.1} parent=1 // pred_region
      %37 = dma.done [#allocation6], 192
    $region17: #{tpu_custom_call.1} parent=1 // pred_fallthru
      _
    %v39 = vld [vmem:[#allocation2] sm:$0xff]
    %v40 = vld [vmem:[#allocation2 + $0x8] sm:$0xff]
    %v41 = vld [vmem:[#allocation2 + $0x10] sm:$0xff]
    %v45 = vcombine.high %v39, %v39
    %v46 = vcombine.high %v40, %v40
    %v47 = vcombine.high %v41, %v41
    %51 = vrot.lane.b32.xlu0 %v39, 127
    %v52 = vpop.permute.xlu0 %51
    %53 = vrot.lane.b32.xlu0 %v45, 127
    %v54 = vpop.permute.xlu0 %53
    %55 = vrot.lane.b32.xlu0 %v40, 127
    %v56 = vpop.permute.xlu0 %55
    %57 = vrot.lane.b32.xlu0 %v46, 127
    %v58 = vpop.permute.xlu0 %57
    %59 = vrot.lane.b32.xlu0 %v41, 127
    %v60 = vpop.permute.xlu0 %59
    %61 = vrot.lane.b32.xlu0 %v47, 127
    %v62 = vpop.permute.xlu0 %61
    %v63 = vlaneseq
    %v64 = vand.u32 %v63, 127
    %vm65 = vcmp.lt.s32.totalorder %v64, 127
    %v66 = vsel %vm65, %v60, %v62
    %v67 = vsel %vm65, %v58, %v60
    %v68 = vsel %vm65, %v56, %v58
    %v69 = vsel %vm65, %v54, %v56
    %v70 = vsel %vm65, %v52, %v54
    %v71 = vsel %vm65, %v62, %v52
    %72 = vrot.lane.b32.xlu0 %v39, 126
    %v73 = vpop.permute.xlu0 %72
    %74 = vrot.lane.b32.xlu0 %v45, 126
    %v75 = vpop.permute.xlu0 %74
    %76 = vrot.lane.b32.xlu0 %v40, 126
    %v77 = vpop.permute.xlu0 %76
    %78 = vrot.lane.b32.xlu0 %v46, 126
    %v79 = vpop.permute.xlu0 %78
    %80 = vrot.lane.b32.xlu0 %v41, 126
    %v81 = vpop.permute.xlu0 %80
    %82 = vrot.lane.b32.xlu0 %v47, 126
    %v83 = vpop.permute.xlu0 %82
    %vm84 = vcmp.lt.s32.totalorder %v64, 126
    %v85 = vsel %vm84, %v81, %v83
    %v86 = vsel %vm84, %v79, %v81
    %v87 = vsel %vm84, %v77, %v79
    %v88 = vsel %vm84, %v75, %v77
    %v89 = vsel %vm84, %v73, %v75
    %v90 = vsel %vm84, %v83, %v73
    %91 = vrot.lane.b32.xlu0 %v39, 110
    %v92 = vpop.permute.xlu0 %91
    %93 = vrot.lane.b32.xlu0 %v45, 110
    %v94 = vpop.permute.xlu0 %93
    %95 = vrot.lane.b32.xlu0 %v40, 110
    %v96 = vpop.permute.xlu0 %95
    %97 = vrot.lane.b32.xlu0 %v46, 110
    %v98 = vpop.permute.xlu0 %97
    %99 = vrot.lane.b32.xlu0 %v41, 110
    %v100 = vpop.permute.xlu0 %99
    %101 = vrot.lane.b32.xlu0 %v47, 110
    %v102 = vpop.permute.xlu0 %101
    %vm103 = vcmp.lt.s32.totalorder %v64, 110
    %v104 = vsel %vm103, %v100, %v102
    %v105 = vsel %vm103, %v98, %v100
    %v106 = vsel %vm103, %v96, %v98
    %v107 = vsel %vm103, %v94, %v96
    %v108 = vsel %vm103, %v92, %v94
    %v109 = vsel %vm103, %v102, %v92
    %110 = vrot.lane.b32.xlu0 %v39, 109
    %v111 = vpop.permute.xlu0 %110
    %112 = vrot.lane.b32.xlu0 %v45, 109
    %v113 = vpop.permute.xlu0 %112
    %114 = vrot.lane.b32.xlu0 %v40, 109
    %v115 = vpop.permute.xlu0 %114
    %116 = vrot.lane.b32.xlu0 %v46, 109
    %v117 = vpop.permute.xlu0 %116
    %118 = vrot.lane.b32.xlu0 %v41, 109
    %v119 = vpop.permute.xlu0 %118
    %120 = vrot.lane.b32.xlu0 %v47, 109
    %v121 = vpop.permute.xlu0 %120
    %vm122 = vcmp.lt.s32.totalorder %v64, 109
    %v123 = vsel %vm122, %v119, %v121
    %v124 = vsel %vm122, %v117, %v119
    %v125 = vsel %vm122, %v115, %v117
    %v126 = vsel %vm122, %v113, %v115
    %v127 = vsel %vm122, %v111, %v113
    %v128 = vsel %vm122, %v121, %v111
    %129 = vrot.lane.b32.xlu0 %v39, 108
    %v130 = vpop.permute.xlu0 %129
    %131 = vrot.lane.b32.xlu0 %v45, 108
    %v132 = vpop.permute.xlu0 %131
    %133 = vrot.lane.b32.xlu0 %v40, 108
    %v134 = vpop.permute.xlu0 %133
    %135 = vrot.lane.b32.xlu0 %v46, 108
    %v136 = vpop.permute.xlu0 %135
    %137 = vrot.lane.b32.xlu0 %v41, 108
    %v138 = vpop.permute.xlu0 %137
    %139 = vrot.lane.b32.xlu0 %v47, 108
    %v140 = vpop.permute.xlu0 %139
    %vm141 = vcmp.lt.s32.totalorder %v64, 108
    %v142 = vsel %vm141, %v138, %v140
    %v143 = vsel %vm141, %v136, %v138
    %v144 = vsel %vm141, %v134, %v136
    %v145 = vsel %vm141, %v132, %v134
    %v146 = vsel %vm141, %v130, %v132
    %v147 = vsel %vm141, %v140, %v130
    %148 = vrot.lane.b32.xlu0 %v39, 92
    %v149 = vpop.permute.xlu0 %148
    %150 = vrot.lane.b32.xlu0 %v45, 92
    %v151 = vpop.permute.xlu0 %150
    %152 = vrot.lane.b32.xlu0 %v40, 92
    %v153 = vpop.permute.xlu0 %152
    %154 = vrot.lane.b32.xlu0 %v46, 92
    %v155 = vpop.permute.xlu0 %154
    %156 = vrot.lane.b32.xlu0 %v41, 92
    %v157 = vpop.permute.xlu0 %156
    %158 = vrot.lane.b32.xlu0 %v47, 92
    %v159 = vpop.permute.xlu0 %158
    %vm160 = vcmp.lt.s32.totalorder %v64, 92
    %v161 = vsel %vm160, %v157, %v159
    %v162 = vsel %vm160, %v155, %v157
    %v163 = vsel %vm160, %v153, %v155
    %v164 = vsel %vm160, %v151, %v153
    %v165 = vsel %vm160, %v149, %v151
    %v166 = vsel %vm160, %v159, %v149
    %167 = vrot.lane.b32.xlu0 %v39, 91
    %v168 = vpop.permute.xlu0 %167
    %169 = vrot.lane.b32.xlu0 %v45, 91
    %v170 = vpop.permute.xlu0 %169
    %171 = vrot.lane.b32.xlu0 %v40, 91
    %v172 = vpop.permute.xlu0 %171
    %173 = vrot.lane.b32.xlu0 %v46, 91
    %v174 = vpop.permute.xlu0 %173
    %175 = vrot.lane.b32.xlu0 %v41, 91
    %v176 = vpop.permute.xlu0 %175
    %177 = vrot.lane.b32.xlu0 %v47, 91
    %v178 = vpop.permute.xlu0 %177
    %vm179 = vcmp.lt.s32.totalorder %v64, 91
    %v180 = vsel %vm179, %v176, %v178
    %v181 = vsel %vm179, %v174, %v176
    %v182 = vsel %vm179, %v172, %v174
    %v183 = vsel %vm179, %v170, %v172
    %v184 = vsel %vm179, %v168, %v170
    %v185 = vsel %vm179, %v178, %v168
    %186 = vrot.lane.b32.xlu0 %v39, 90
    %v187 = vpop.permute.xlu0 %186
    %188 = vrot.lane.b32.xlu0 %v45, 90
    %v189 = vpop.permute.xlu0 %188
    %190 = vrot.lane.b32.xlu0 %v40, 90
    %v191 = vpop.permute.xlu0 %190
    %192 = vrot.lane.b32.xlu0 %v46, 90
    %v193 = vpop.permute.xlu0 %192
    %194 = vrot.lane.b32.xlu0 %v41, 90
    %v195 = vpop.permute.xlu0 %194
    %196 = vrot.lane.b32.xlu0 %v47, 90
    %v197 = vpop.permute.xlu0 %196
    %vm198 = vcmp.lt.s32.totalorder %v64, 90
    %v199 = vsel %vm198, %v195, %v197
    %v200 = vsel %vm198, %v193, %v195
    %v201 = vsel %vm198, %v191, %v193
    %v202 = vsel %vm198, %v189, %v191
    %v203 = vsel %vm198, %v187, %v189
    %v204 = vsel %vm198, %v197, %v187
    %v211 = vrot.slane %v70, 4
    %v212 = vrot.slane %v69, 4
    %v213 = vrot.slane %v68, 4
    %v214 = vrot.slane %v67, 4
    %v215 = vrot.slane %v66, 4
    %v216 = vrot.slane %v71, 4
    %v229 = vrot.slane %v108, 4
    %v230 = vrot.slane %v107, 4
    %v231 = vrot.slane %v106, 4
    %v232 = vrot.slane %v105, 4
    %v233 = vrot.slane %v104, 4
    %v234 = vrot.slane %v109, 4
    %v247 = vrot.slane %v146, 4
    %v248 = vrot.slane %v145, 4
    %v249 = vrot.slane %v144, 4
    %v250 = vrot.slane %v143, 4
    %v251 = vrot.slane %v142, 4
    %v252 = vrot.slane %v147, 4
    %v265 = vrot.slane %v184, 4
    %v266 = vrot.slane %v183, 4
    %v267 = vrot.slane %v182, 4
    %v268 = vrot.slane %v181, 4
    %v269 = vrot.slane %v180, 4
    %v270 = vrot.slane %v185, 4
    %vm277 = vcmask 1043456
    %v278 = vsel %vm277, %v39, %v211
    %v279 = vsel %vm277, %v45, %v212
    %v280 = vsel %vm277, %v40, %v213
    %v281 = vsel %vm277, %v46, %v214
    %v282 = vsel %vm277, %v41, %v215
    %v283 = vsel %vm277, %v47, %v216
    %v284 = vsel %vm277, %v89, %v229
    %v285 = vsel %vm277, %v88, %v230
    %v286 = vsel %vm277, %v87, %v231
    %v287 = vsel %vm277, %v86, %v232
    %v288 = vsel %vm277, %v85, %v233
    %v289 = vsel %vm277, %v90, %v234
    %v290 = vsel %vm277, %v127, %v247
    %v291 = vsel %vm277, %v126, %v248
    %v292 = vsel %vm277, %v125, %v249
    %v293 = vsel %vm277, %v124, %v250
    %v294 = vsel %vm277, %v123, %v251
    %v295 = vsel %vm277, %v128, %v252
    %v296 = vsel %vm277, %v165, %v265
    %v297 = vsel %vm277, %v164, %v266
    %v298 = vsel %vm277, %v163, %v267
    %v299 = vsel %vm277, %v162, %v268
    %v300 = vsel %vm277, %v161, %v269
    %v301 = vsel %vm277, %v166, %v270
    %v302 = vsel %vm277, %v203, 1.0
    %v303 = vsel %vm277, %v202, 1.0
    %v304 = vsel %vm277, %v201, 1.0
    %v305 = vsel %vm277, %v200, 1.0
    %v306 = vsel %vm277, %v199, 1.0
    %v307 = vsel %vm277, %v204, 1.0
    %v308 = vpack.c.bf16 %v284, %v278
    %v309 = vpack.c.bf16 %v285, %v279
    %v310 = vpack.c.bf16 %v286, %v280
    %v311 = vpack.c.bf16 %v287, %v281
    %v312 = vpack.c.bf16 %v288, %v282
    %v313 = vpack.c.bf16 %v289, %v283
    %v314 = vpack.c.bf16 %v296, %v290
    %v315 = vpack.c.bf16 %v297, %v291
    %v316 = vpack.c.bf16 %v298, %v292
    %v317 = vpack.c.bf16 %v299, %v293
    %v318 = vpack.c.bf16 %v300, %v294
    %v319 = vpack.c.bf16 %v301, %v295
    %v320 = vpack.c.bf16 %v302, %v302
    %v321 = vpack.c.bf16 %v303, %v303
    %v322 = vpack.c.bf16 %v304, %v304
    %v323 = vpack.c.bf16 %v305, %v305
    %v324 = vpack.c.bf16 %v306, %v306
    %v325 = vpack.c.bf16 %v307, %v307
    %v326 = vld [vmem:[#allocation5] sm:$0xf]
    %vm327 = vcmask 326656
    %v329 = vsel %vm327, %v326, 0
    %v332 = vsel %vm277, %v320, 0
    %v335 = vsel %vm277, %v321, 0
    %v338 = vsel %vm277, %v322, 0
    %v341 = vsel %vm277, %v323, 0
    %v344 = vsel %vm277, %v324, 0
    %v347 = vsel %vm277, %v325, 0
    %349 = vmatprep.subr.bf16.mxu0 0
    %350 = vmatpush1.bf16.msra.mxu0 0
    %351 = vmatprep.subr.bf16.mxu0 0
    %352 = vmatpush1.bf16.msra.mxu0 0
    %353 = vmatprep.subr.bf16.mxu0 0
    %354 = vmatpush1.bf16.msra.mxu0 0
    %355 = vmatprep.subr.bf16.mxu0 0
    %356 = vmatpush1.bf16.msra.mxu0 0
    %357 = vmatprep.subr.bf16.mxu0 0
    %358 = vmatpush1.bf16.msra.mxu0 0
    %359 = vmatprep.subr.bf16.mxu0 %v335
    %360 = vmatpush1.bf16.msra.mxu0 %v332
    %361 = vmatprep.subr.bf16.mxu0 %v315
    %362 = vmatpush1.bf16.msra.mxu0 %v314
    %363 = vmatprep.subr.bf16.mxu0 %v309
    %364 = vmatpush1.bf16.msra.mxu0 %v308
    %365 = vmatprep.subr.bf16.mxu0 0
    %366 = vmatpush2.bf16.msra.mxu0 0
    %367 = vmatprep.subr.bf16.mxu0 0
    %368 = vmatpush2.bf16.msra.mxu0 0
    %369 = vmatprep.subr.bf16.mxu0 0
    %370 = vmatpush2.bf16.msra.mxu0 0
    %371 = vmatprep.subr.bf16.mxu0 0
    %372 = vmatpush2.bf16.msra.mxu0 0
    %373 = vmatprep.subr.bf16.mxu0 0
    %374 = vmatpush2.bf16.msra.mxu0 0
    %375 = vmatprep.subr.bf16.mxu0 0
    %376 = vmatpush2.bf16.msra.mxu0 0
    %377 = vmatprep.subr.bf16.mxu0 0
    %378 = vmatpush2.bf16.msra.mxu0 0
    %379 = vmatprep.subr.bf16.mxu0 0
    %380 = vmatpush2.bf16.msra.mxu0 0
    %381 = vmatprep.mubr.bf16.mxu0 0
    %382 = vmatmul.mubr.bf16.gmra.mxu0 %v329
    %v383 = vpop.f32.mrf.mxu0
    %v384 = vadd.f32 0.0, %v383
    %v385 = vpop.f32.mrf.mxu0
    %v386 = vadd.f32 0.0, %v385
    %v387 = vpop.f32.mrf.mxu0
    %v388 = vpop.f32.mrf.mxu0
    %389 = vdwg.mxu0
    %390 = vmatprep.subr.bf16.mxu0 0
    %391 = vmatpush1.bf16.msra.mxu0 0
    %392 = vmatprep.subr.bf16.mxu0 0
    %393 = vmatpush1.bf16.msra.mxu0 0
    %394 = vmatprep.subr.bf16.mxu0 0
    %395 = vmatpush1.bf16.msra.mxu0 0
    %396 = vmatprep.subr.bf16.mxu0 0
    %397 = vmatpush1.bf16.msra.mxu0 0
    %398 = vmatprep.subr.bf16.mxu0 0
    %399 = vmatpush1.bf16.msra.mxu0 0
    %400 = vmatprep.subr.bf16.mxu0 %v341
    %401 = vmatpush1.bf16.msra.mxu0 %v338
    %402 = vmatprep.subr.bf16.mxu0 %v317
    %403 = vmatpush1.bf16.msra.mxu0 %v316
    %404 = vmatprep.subr.bf16.mxu0 %v311
    %405 = vmatpush1.bf16.msra.mxu0 %v310
    %406 = vmatprep.subr.bf16.mxu0 0
    %407 = vmatpush2.bf16.msra.mxu0 0
    %408 = vmatprep.subr.bf16.mxu0 0
    %409 = vmatpush2.bf16.msra.mxu0 0
    %410 = vmatprep.subr.bf16.mxu0 0
    %411 = vmatpush2.bf16.msra.mxu0 0
    %412 = vmatprep.subr.bf16.mxu0 0
    %413 = vmatpush2.bf16.msra.mxu0 0
    %414 = vmatprep.subr.bf16.mxu0 0
    %415 = vmatpush2.bf16.msra.mxu0 0
    %416 = vmatprep.subr.bf16.mxu0 0
    %417 = vmatpush2.bf16.msra.mxu0 0
    %418 = vmatprep.subr.bf16.mxu0 0
    %419 = vmatpush2.bf16.msra.mxu0 0
    %420 = vmatprep.subr.bf16.mxu0 0
    %421 = vmatpush2.bf16.msra.mxu0 0
    %422 = vmatprep.mubr.bf16.mxu0 0
    %423 = vmatmul.mubr.bf16.gmra.mxu0 %v329
    %v424 = vpop.f32.mrf.mxu0
    %v425 = vadd.f32 0.0, %v424
    %v426 = vpop.f32.mrf.mxu0
    %v427 = vadd.f32 0.0, %v426
    %v428 = vpop.f32.mrf.mxu0
    %v429 = vpop.f32.mrf.mxu0
    %430 = vdwg.mxu0
    %431 = vmatprep.subr.bf16.mxu0 0
    %432 = vmatpush1.bf16.msra.mxu0 0
    %433 = vmatprep.subr.bf16.mxu0 0
    %434 = vmatpush1.bf16.msra.mxu0 0
    %435 = vmatprep.subr.bf16.mxu0 0
    %436 = vmatpush1.bf16.msra.mxu0 0
    %437 = vmatprep.subr.bf16.mxu0 0
    %438 = vmatpush1.bf16.msra.mxu0 0
    %439 = vmatprep.subr.bf16.mxu0 0
    %440 = vmatpush1.bf16.msra.mxu0 0
    %441 = vmatprep.subr.bf16.mxu0 %v347
    %442 = vmatpush1.bf16.msra.mxu0 %v344
    %443 = vmatprep.subr.bf16.mxu0 %v319
    %444 = vmatpush1.bf16.msra.mxu0 %v318
    %445 = vmatprep.subr.bf16.mxu0 %v313
    %446 = vmatpush1.bf16.msra.mxu0 %v312
    %447 = vmatprep.subr.bf16.mxu0 0
    %448 = vmatpush2.bf16.msra.mxu0 0
    %449 = vmatprep.subr.bf16.mxu0 0
    %450 = vmatpush2.bf16.msra.mxu0 0
    %451 = vmatprep.subr.bf16.mxu0 0
    %452 = vmatpush2.bf16.msra.mxu0 0
    %453 = vmatprep.subr.bf16.mxu0 0
    %454 = vmatpush2.bf16.msra.mxu0 0
    %455 = vmatprep.subr.bf16.mxu0 0
    %456 = vmatpush2.bf16.msra.mxu0 0
    %457 = vmatprep.subr.bf16.mxu0 0
    %458 = vmatpush2.bf16.msra.mxu0 0
    %459 = vmatprep.subr.bf16.mxu0 0
    %460 = vmatpush2.bf16.msra.mxu0 0
    %461 = vmatprep.subr.bf16.mxu0 0
    %462 = vmatpush2.bf16.msra.mxu0 0
    %463 = vmatprep.mubr.bf16.mxu0 0
    %464 = vmatmul.mubr.bf16.gmra.mxu0 %v329
    %v465 = vpop.f32.mrf.mxu0
    %v466 = vadd.f32 0.0, %v465
    %v467 = vpop.f32.mrf.mxu0
    %v468 = vadd.f32 0.0, %v467
    %v469 = vpop.f32.mrf.mxu0
    %v470 = vpop.f32.mrf.mxu0
    %471 = vdwg.mxu0
    %v472 = vmax.f32 %v384, 0.0
    %v473 = vmax.f32 %v386, 0.0
    %v474 = vmax.f32 %v425, 0.0
    %v475 = vmax.f32 %v427, 0.0
    %v476 = vmax.f32 %v466, 0.0
    %v477 = vmax.f32 %v468, 0.0
    %478 = vrot.lane.b32.xlu0 %v472, 127
    %v479 = vpop.permute.xlu0 %478
    %480 = vrot.lane.b32.xlu0 %v473, 127
    %v481 = vpop.permute.xlu0 %480
    %482 = vrot.lane.b32.xlu0 %v474, 127
    %v483 = vpop.permute.xlu0 %482
    %484 = vrot.lane.b32.xlu0 %v475, 127
    %v485 = vpop.permute.xlu0 %484
    %486 = vrot.lane.b32.xlu0 %v476, 127
    %v487 = vpop.permute.xlu0 %486
    %488 = vrot.lane.b32.xlu0 %v477, 127
    %v489 = vpop.permute.xlu0 %488
    %v490 = vsel %vm65, %v487, %v489
    %v491 = vsel %vm65, %v485, %v487
    %v492 = vsel %vm65, %v483, %v485
    %v493 = vsel %vm65, %v481, %v483
    %v494 = vsel %vm65, %v479, %v481
    %v495 = vsel %vm65, %v489, %v479
    %496 = vrot.lane.b32.xlu0 %v472, 126
    %v497 = vpop.permute.xlu0 %496
    %498 = vrot.lane.b32.xlu0 %v473, 126
    %v499 = vpop.permute.xlu0 %498
    %500 = vrot.lane.b32.xlu0 %v474, 126
    %v501 = vpop.permute.xlu0 %500
    %502 = vrot.lane.b32.xlu0 %v475, 126
    %v503 = vpop.permute.xlu0 %502
    %504 = vrot.lane.b32.xlu0 %v476, 126
    %v505 = vpop.permute.xlu0 %504
    %506 = vrot.lane.b32.xlu0 %v477, 126
    %v507 = vpop.permute.xlu0 %506
    %v508 = vsel %vm84, %v505, %v507
    %v509 = vsel %vm84, %v503, %v505
    %v510 = vsel %vm84, %v501, %v503
    %v511 = vsel %vm84, %v499, %v501
    %v512 = vsel %vm84, %v497, %v499
    %v513 = vsel %vm84, %v507, %v497
    %514 = vrot.lane.b32.xlu0 %v472, 110
    %v515 = vpop.permute.xlu0 %514
    %516 = vrot.lane.b32.xlu0 %v473, 110
    %v517 = vpop.permute.xlu0 %516
    %518 = vrot.lane.b32.xlu0 %v474, 110
    %v519 = vpop.permute.xlu0 %518
    %520 = vrot.lane.b32.xlu0 %v475, 110
    %v521 = vpop.permute.xlu0 %520
    %522 = vrot.lane.b32.xlu0 %v476, 110
    %v523 = vpop.permute.xlu0 %522
    %524 = vrot.lane.b32.xlu0 %v477, 110
    %v525 = vpop.permute.xlu0 %524
    %v526 = vsel %vm103, %v523, %v525
    %v527 = vsel %vm103, %v521, %v523
    %v528 = vsel %vm103, %v519, %v521
    %v529 = vsel %vm103, %v517, %v519
    %v530 = vsel %vm103, %v515, %v517
    %v531 = vsel %vm103, %v525, %v515
    %532 = vrot.lane.b32.xlu0 %v472, 109
    %v533 = vpop.permute.xlu0 %532
    %534 = vrot.lane.b32.xlu0 %v473, 109
    %v535 = vpop.permute.xlu0 %534
    %536 = vrot.lane.b32.xlu0 %v474, 109
    %v537 = vpop.permute.xlu0 %536
    %538 = vrot.lane.b32.xlu0 %v475, 109
    %v539 = vpop.permute.xlu0 %538
    %540 = vrot.lane.b32.xlu0 %v476, 109
    %v541 = vpop.permute.xlu0 %540
    %542 = vrot.lane.b32.xlu0 %v477, 109
    %v543 = vpop.permute.xlu0 %542
    %v544 = vsel %vm122, %v541, %v543
    %v545 = vsel %vm122, %v539, %v541
    %v546 = vsel %vm122, %v537, %v539
    %v547 = vsel %vm122, %v535, %v537
    %v548 = vsel %vm122, %v533, %v535
    %v549 = vsel %vm122, %v543, %v533
    %550 = vrot.lane.b32.xlu0 %v472, 108
    %v551 = vpop.permute.xlu0 %550
    %552 = vrot.lane.b32.xlu0 %v473, 108
    %v553 = vpop.permute.xlu0 %552
    %554 = vrot.lane.b32.xlu0 %v474, 108
    %v555 = vpop.permute.xlu0 %554
    %556 = vrot.lane.b32.xlu0 %v475, 108
    %v557 = vpop.permute.xlu0 %556
    %558 = vrot.lane.b32.xlu0 %v476, 108
    %v559 = vpop.permute.xlu0 %558
    %560 = vrot.lane.b32.xlu0 %v477, 108
    %v561 = vpop.permute.xlu0 %560
    %v562 = vsel %vm141, %v559, %v561
    %v563 = vsel %vm141, %v557, %v559
    %v564 = vsel %vm141, %v555, %v557
    %v565 = vsel %vm141, %v553, %v555
    %v566 = vsel %vm141, %v551, %v553
    %v567 = vsel %vm141, %v561, %v551
    %568 = vrot.lane.b32.xlu0 %v472, 92
    %v569 = vpop.permute.xlu0 %568
    %570 = vrot.lane.b32.xlu0 %v473, 92
    %v571 = vpop.permute.xlu0 %570
    %572 = vrot.lane.b32.xlu0 %v474, 92
    %v573 = vpop.permute.xlu0 %572
    %574 = vrot.lane.b32.xlu0 %v475, 92
    %v575 = vpop.permute.xlu0 %574
    %576 = vrot.lane.b32.xlu0 %v476, 92
    %v577 = vpop.permute.xlu0 %576
    %578 = vrot.lane.b32.xlu0 %v477, 92
    %v579 = vpop.permute.xlu0 %578
    %v580 = vsel %vm160, %v577, %v579
    %v581 = vsel %vm160, %v575, %v577
    %v582 = vsel %vm160, %v573, %v575
    %v583 = vsel %vm160, %v571, %v573
    %v584 = vsel %vm160, %v569, %v571
    %v585 = vsel %vm160, %v579, %v569
    %586 = vrot.lane.b32.xlu0 %v472, 91
    %v587 = vpop.permute.xlu0 %586
    %588 = vrot.lane.b32.xlu0 %v473, 91
    %v589 = vpop.permute.xlu0 %588
    %590 = vrot.lane.b32.xlu0 %v474, 91
    %v591 = vpop.permute.xlu0 %590
    %592 = vrot.lane.b32.xlu0 %v475, 91
    %v593 = vpop.permute.xlu0 %592
    %594 = vrot.lane.b32.xlu0 %v476, 91
    %v595 = vpop.permute.xlu0 %594
    %596 = vrot.lane.b32.xlu0 %v477, 91
    %v597 = vpop.permute.xlu0 %596
    %v598 = vsel %vm179, %v595, %v597
    %v599 = vsel %vm179, %v593, %v595
    %v600 = vsel %vm179, %v591, %v593
    %v601 = vsel %vm179, %v589, %v591
    %v602 = vsel %vm179, %v587, %v589
    %v603 = vsel %vm179, %v597, %v587
    %604 = vrot.lane.b32.xlu0 %v472, 90
    %v605 = vpop.permute.xlu0 %604
    %606 = vrot.lane.b32.xlu0 %v473, 90
    %v607 = vpop.permute.xlu0 %606
    %608 = vrot.lane.b32.xlu0 %v474, 90
    %v609 = vpop.permute.xlu0 %608
    %610 = vrot.lane.b32.xlu0 %v475, 90
    %v611 = vpop.permute.xlu0 %610
    %612 = vrot.lane.b32.xlu0 %v476, 90
    %v613 = vpop.permute.xlu0 %612
    %614 = vrot.lane.b32.xlu0 %v477, 90
    %v615 = vpop.permute.xlu0 %614
    %v616 = vsel %vm198, %v613, %v615
    %v617 = vsel %vm198, %v611, %v613
    %v618 = vsel %vm198, %v609, %v611
    %v619 = vsel %vm198, %v607, %v609
    %v620 = vsel %vm198, %v605, %v607
    %v621 = vsel %vm198, %v615, %v605
    %v622 = vpack.c.bf16 %v494, %v472
    %v623 = vpack.c.bf16 %v493, %v473
    %v624 = vpack.c.bf16 %v492, %v474
    %v625 = vpack.c.bf16 %v491, %v475
    %v626 = vpack.c.bf16 %v490, %v476
    %v627 = vpack.c.bf16 %v495, %v477
    %v628 = vpack.c.bf16 %v530, %v512
    %v629 = vpack.c.bf16 %v529, %v511
    %v630 = vpack.c.bf16 %v528, %v510
    %v631 = vpack.c.bf16 %v527, %v509
    %v632 = vpack.c.bf16 %v526, %v508
    %v633 = vpack.c.bf16 %v531, %v513
    %v634 = vpack.c.bf16 %v566, %v548
    %v635 = vpack.c.bf16 %v565, %v547
    %v636 = vpack.c.bf16 %v564, %v546
    %v637 = vpack.c.bf16 %v563, %v545
    %v638 = vpack.c.bf16 %v562, %v544
    %v639 = vpack.c.bf16 %v567, %v549
    %v640 = vpack.c.bf16 %v602, %v584
    %v641 = vpack.c.bf16 %v601, %v583
    %v642 = vpack.c.bf16 %v600, %v582
    %v643 = vpack.c.bf16 %v599, %v581
    %v644 = vpack.c.bf16 %v598, %v580
    %v645 = vpack.c.bf16 %v603, %v585
    %v646 = vpack.c.bf16 1.0, %v620
    %v647 = vpack.c.bf16 1.0, %v619
    %v648 = vpack.c.bf16 1.0, %v618
    %v649 = vpack.c.bf16 1.0, %v617
    %v650 = vpack.c.bf16 1.0, %v616
    %v651 = vpack.c.bf16 1.0, %v621
    %v652 = vld [vmem:[#allocation5 + $0x4] sm:$0xf]
    %v653 = vld [vmem:[#allocation5 + $0x8] sm:$0xf]
    %v656 = vunpack.c.l.b16 %v652
    %v657 = vunpack.c.l.b16 %v653
    %v658 = vpack.c.b16 %v657, %v656
    %vm659 = vcmask 654336
    %v661 = vsel %vm659, %v658, 0
    %663 = vmatprep.subr.bf16.mxu0 0
    %664 = vmatpush1.bf16.msra.mxu0 0
    %665 = vmatprep.subr.bf16.mxu0 0
    %666 = vmatpush1.bf16.msra.mxu0 0
    %667 = vmatprep.subr.bf16.mxu0 0
    %668 = vmatpush1.bf16.msra.mxu0 0
    %669 = vmatprep.subr.bf16.mxu0 %v647
    %670 = vmatpush1.bf16.msra.mxu0 %v646
    %671 = vmatprep.subr.bf16.mxu0 %v641
    %672 = vmatpush1.bf16.msra.mxu0 %v640
    %673 = vmatprep.subr.bf16.mxu0 %v635
    %674 = vmatpush1.bf16.msra.mxu0 %v634
    %675 = vmatprep.subr.bf16.mxu0 %v629
    %676 = vmatpush1.bf16.msra.mxu0 %v628
    %677 = vmatprep.subr.bf16.mxu0 %v623
    %678 = vmatpush1.bf16.msra.mxu0 %v622
    %679 = vmatprep.subr.bf16.mxu0 0
    %680 = vmatpush2.bf16.msra.mxu0 0
    %681 = vmatprep.subr.bf16.mxu0 0
    %682 = vmatpush2.bf16.msra.mxu0 0
    %683 = vmatprep.subr.bf16.mxu0 0
    %684 = vmatpush2.bf16.msra.mxu0 0
    %685 = vmatprep.subr.bf16.mxu0 0
    %686 = vmatpush2.bf16.msra.mxu0 0
    %687 = vmatprep.subr.bf16.mxu0 0
    %688 = vmatpush2.bf16.msra.mxu0 0
    %689 = vmatprep.subr.bf16.mxu0 0
    %690 = vmatpush2.bf16.msra.mxu0 0
    %691 = vmatprep.subr.bf16.mxu0 0
    %692 = vmatpush2.bf16.msra.mxu0 0
    %693 = vmatprep.subr.bf16.mxu0 0
    %694 = vmatpush2.bf16.msra.mxu0 0
    %695 = vmatprep.mubr.bf16.mxu0 0
    %696 = vmatmul.mubr.bf16.gmra.mxu0 %v661
    %v697 = vpop.f32.mrf.mxu0
    %v698 = vadd.f32 0.0, %v697
    %v699 = vpop.f32.mrf.mxu0
    %v700 = vadd.f32 0.0, %v699
    %v701 = vpop.f32.mrf.mxu0
    %v702 = vadd.f32 0.0, %v701
    %v703 = vpop.f32.mrf.mxu0
    %v704 = vadd.f32 0.0, %v703
    %705 = vdwg.mxu0
    %706 = vmatprep.subr.bf16.mxu0 0
    %707 = vmatpush1.bf16.msra.mxu0 0
    %708 = vmatprep.subr.bf16.mxu0 0
    %709 = vmatpush1.bf16.msra.mxu0 0
    %710 = vmatprep.subr.bf16.mxu0 0
    %711 = vmatpush1.bf16.msra.mxu0 0
    %712 = vmatprep.subr.bf16.mxu0 %v649
    %713 = vmatpush1.bf16.msra.mxu0 %v648
    %714 = vmatprep.subr.bf16.mxu0 %v643
    %715 = vmatpush1.bf16.msra.mxu0 %v642
    %716 = vmatprep.subr.bf16.mxu0 %v637
    %717 = vmatpush1.bf16.msra.mxu0 %v636
    %718 = vmatprep.subr.bf16.mxu0 %v631
    %719 = vmatpush1.bf16.msra.mxu0 %v630
    %720 = vmatprep.subr.bf16.mxu0 %v625
    %721 = vmatpush1.bf16.msra.mxu0 %v624
    %722 = vmatprep.subr.bf16.mxu0 0
    %723 = vmatpush2.bf16.msra.mxu0 0
    %724 = vmatprep.subr.bf16.mxu0 0
    %725 = vmatpush2.bf16.msra.mxu0 0
    %726 = vmatprep.subr.bf16.mxu0 0
    %727 = vmatpush2.bf16.msra.mxu0 0
    %728 = vmatprep.subr.bf16.mxu0 0
    %729 = vmatpush2.bf16.msra.mxu0 0
    %730 = vmatprep.subr.bf16.mxu0 0
    %731 = vmatpush2.bf16.msra.mxu0 0
    %732 = vmatprep.subr.bf16.mxu0 0
    %733 = vmatpush2.bf16.msra.mxu0 0
    %734 = vmatprep.subr.bf16.mxu0 0
    %735 = vmatpush2.bf16.msra.mxu0 0
    %736 = vmatprep.subr.bf16.mxu0 0
    %737 = vmatpush2.bf16.msra.mxu0 0
    %738 = vmatprep.mubr.bf16.mxu0 0
    %739 = vmatmul.mubr.bf16.gmra.mxu0 %v661
    %v740 = vpop.f32.mrf.mxu0
    %v741 = vadd.f32 0.0, %v740
    %v742 = vpop.f32.mrf.mxu0
    %v743 = vadd.f32 0.0, %v742
    %v744 = vpop.f32.mrf.mxu0
    %v745 = vadd.f32 0.0, %v744
    %v746 = vpop.f32.mrf.mxu0
    %v747 = vadd.f32 0.0, %v746
    %748 = vdwg.mxu0
    %749 = vmatprep.subr.bf16.mxu0 0
    %750 = vmatpush1.bf16.msra.mxu0 0
    %751 = vmatprep.subr.bf16.mxu0 0
    %752 = vmatpush1.bf16.msra.mxu0 0
    %753 = vmatprep.subr.bf16.mxu0 0
    %754 = vmatpush1.bf16.msra.mxu0 0
    %755 = vmatprep.subr.bf16.mxu0 %v651
    %756 = vmatpush1.bf16.msra.mxu0 %v650
    %757 = vmatprep.subr.bf16.mxu0 %v645
    %758 = vmatpush1.bf16.msra.mxu0 %v644
    %759 = vmatprep.subr.bf16.mxu0 %v639
    %760 = vmatpush1.bf16.msra.mxu0 %v638
    %761 = vmatprep.subr.bf16.mxu0 %v633
    %762 = vmatpush1.bf16.msra.mxu0 %v632
    %763 = vmatprep.subr.bf16.mxu0 %v627
    %764 = vmatpush1.bf16.msra.mxu0 %v626
    %765 = vmatprep.subr.bf16.mxu0 0
    %766 = vmatpush2.bf16.msra.mxu0 0
    %767 = vmatprep.subr.bf16.mxu0 0
    %768 = vmatpush2.bf16.msra.mxu0 0
    %769 = vmatprep.subr.bf16.mxu0 0
    %770 = vmatpush2.bf16.msra.mxu0 0
    %771 = vmatprep.subr.bf16.mxu0 0
    %772 = vmatpush2.bf16.msra.mxu0 0
    %773 = vmatprep.subr.bf16.mxu0 0
    %774 = vmatpush2.bf16.msra.mxu0 0
    %775 = vmatprep.subr.bf16.mxu0 0
    %776 = vmatpush2.bf16.msra.mxu0 0
    %777 = vmatprep.subr.bf16.mxu0 0
    %778 = vmatpush2.bf16.msra.mxu0 0
    %779 = vmatprep.subr.bf16.mxu0 0
    %780 = vmatpush2.bf16.msra.mxu0 0
    %781 = vmatprep.mubr.bf16.mxu0 0
    %782 = vmatmul.mubr.bf16.gmra.mxu0 %v661
    %v783 = vpop.f32.mrf.mxu0
    %v784 = vadd.f32 0.0, %v783
    %v785 = vpop.f32.mrf.mxu0
    %v786 = vadd.f32 0.0, %v785
    %v787 = vpop.f32.mrf.mxu0
    %v788 = vadd.f32 0.0, %v787
    %v789 = vpop.f32.mrf.mxu0
    %v790 = vadd.f32 0.0, %v789
    %791 = vdwg.mxu0
    %v792 = vmax.f32 %v698, 0.0
    %v793 = vmax.f32 %v700, 0.0
    %v794 = vmax.f32 %v741, 0.0
    %v795 = vmax.f32 %v743, 0.0
    %v796 = vmax.f32 %v784, 0.0
    %v797 = vmax.f32 %v786, 0.0
    %v798 = vmax.f32 %v702, 0.0
    %v799 = vmax.f32 %v704, 0.0
    %v800 = vmax.f32 %v745, 0.0
    %v801 = vmax.f32 %v747, 0.0
    %v802 = vmax.f32 %v788, 0.0
    %v803 = vmax.f32 %v790, 0.0
    %804 = vst [vmem:[#allocation7] sm:$0xff] %v792
    %805 = vst [vmem:[#allocation7 + $0x8] sm:$0xff] %v793
    %806 = vst [vmem:[#allocation7 + $0x10] sm:$0xff] %v794
    %807 = vst [vmem:[#allocation7 + $0x18] sm:$0xff] %v795
    %808 = vst [vmem:[#allocation7 + $0x20] sm:$0xff] %v796
    %809 = vst [vmem:[#allocation7 + $0x28] sm:$0xff] %v797
    %810 = vst [vmem:[#allocation7 + $0x30] sm:$0xff] %v798
    %811 = vst [vmem:[#allocation7 + $0x38] sm:$0xff] %v799
    %812 = vst [vmem:[#allocation7 + $0x40] sm:$0xff] %v800
    %813 = vst [vmem:[#allocation7 + $0x48] sm:$0xff] %v801
    %814 = vst [vmem:[#allocation7 + $0x50] sm:$0xff] %v802
    %815 = vst [vmem:[#allocation7 + $0x58] sm:$0xff] %v803
    // Predicated region
    $region18: #{tpu_custom_call.1} parent=1 // pred_check
      _
    $region19: #{tpu_custom_call.1} parent=1 // pred_check_branch
      %817 = sbr.rel (0) target = $region21
    $region20: #{tpu_custom_call.1} parent=1 // pred_region
      %s819 = ssub.s32 1536, 1536
      %820 = vsyncadd [#allocation4], %s819
      %s821 = sshll.u32 [#allocation7], 4
      %s822 = int_to_ptr.vmem [resolvable:$true] %s821
      %827 = dma.vmem_to_hbm [thread:$0]  %s822, 1536, %s2, [#allocation4], 768, 768, 48
    $region21: #{tpu_custom_call.1} parent=1 // pred_fallthru
      _
    // Predicated region
    $region22: #{tpu_custom_call.1} parent=1 // pred_check
      _
    $region23: #{tpu_custom_call.1} parent=1 // pred_check_branch
      %829 = sbr.rel (0) target = $region25
    $region24: #{tpu_custom_call.1} parent=1 // pred_region
      %830 = dma.done [#allocation4], 1536
    $region25: #{tpu_custom_call.1} parent=1 // pred_fallthru
      _
    %831 = vsyncpa [#allocation3], 1
    %832 = vsyncpa [#allocation6], 1
    %833 = vsyncpa [#allocation4], 1

</llo_original>
